<compile_context>
chip_gen: v7x
topology: tpu7x:2x2x1
jax: 0.10.0
libtpu: 0.0.40
codegen_flags: <defaults>
</compile_context>

<pallas_src>
import jax
import jax.numpy as jnp
from jax.experimental import pallas as pl
from jax.experimental.pallas import tpu as pltpu

QUANTUM_DIM = 8
INPUT_DIM = 32
HIDDEN_DIM = 8 * QUANTUM_DIM          # 64
OUT_DIM = 2 * QUANTUM_DIM + 1         # 17
BATCH = 2

LANE = 128                            # padded hidden/output width (vreg lanes / MXU N)
MAX_TILE = 512                        # batch-tile cap (amortizes ~0.35 us/step overhead)


def _round_up(x: int, m: int) -> int:
    return ((x + m - 1) // m) * m


def quantum_encoder_kernel(x_ref, w1_ref, b1_ref, w2_ref, w3_ref, out_ref):
    """x_ref : (TB, 32)  raw input rows (no lane padding in HBM).
    w1_ref: (32, 128)  padded W1 (cols >= HIDDEN_DIM are zero).
    b1_ref: (1, 128)   b1 in cols [0, HIDDEN), constant 1.0 at col HIDDEN (bias carrier).
    w2_ref/w3_ref: (128, 128) padded weights with b2/b3 folded into row HIDDEN.
    out_ref: (TB, 128) lane-dense slab; cols [0, 2q) = normalized mu,
             col 2q = raw kappa logit (softplus applied in the wrapper)."""
    x = x_ref[...]

    # Layer 1: MXU matmul + broadcast bias row (the bias row also injects the
    # constant-1 into lane HIDDEN_DIM; relu(1) = 1 keeps it alive for layers 2/3).
    h = jnp.dot(x, w1_ref[...], preferred_element_type=jnp.float32) + b1_ref[...]
    h = jnp.maximum(h, 0.0)
    # Layers 2/3: biases already folded via the constant-1 lane.
    h = jnp.maximum(jnp.dot(h, w2_ref[...], preferred_element_type=jnp.float32), 0.0)
    out = jnp.dot(h, w3_ref[...], preferred_element_type=jnp.float32)   # (TB, 128)

    lane = jax.lax.broadcasted_iota(jnp.int32, out.shape, 1)
    mu_mask = lane < 2 * QUANTUM_DIM

    # L2 norm over the mu lanes only (padding lanes are exactly zero anyway,
    # but mask defensively so kappa's lane never leaks in).
    mu_vals = jnp.where(mu_mask, out, 0.0)
    norm = jnp.sqrt(jnp.sum(mu_vals * mu_vals, axis=-1, keepdims=True))   # (TB, 1)
    inv = 1.0 / (norm + 1e-8)          # one (TB,1)-column divide; negligible cost

    # mu lanes normalized, everything else (incl. kappa logit) passes through raw.
    out_ref[...] = jnp.where(mu_mask, out * inv, out)


def pack_params(params):
    """Pad weights for the MXU and fold biases.

    Column layout of the activations:
      input x    : [x_0..x_31]                         (no padding in HBM)
      hidden h   : [h_0..h_63, 1@col HIDDEN, 0-pad]
      output out : [mu(16), kappa(1), 0-pad]
    """
    w1, b1, w2, b2, w3, b3 = params
    ones_col = HIDDEN_DIM   # index of the propagated constant-1 column in hidden layers

    w1p = jnp.zeros((INPUT_DIM, LANE), jnp.float32)
    w1p = w1p.at[:, :HIDDEN_DIM].set(w1)

    b1p = jnp.zeros((1, LANE), jnp.float32)
    b1p = b1p.at[0, :HIDDEN_DIM].set(b1.reshape(-1))
    b1p = b1p.at[0, ones_col].set(1.0)                  # constant-1 carrier for b2/b3

    w2p = jnp.zeros((LANE, LANE), jnp.float32)
    w2p = w2p.at[:HIDDEN_DIM, :HIDDEN_DIM].set(w2)
    w2p = w2p.at[ones_col, :HIDDEN_DIM].set(b2.reshape(-1))
    w2p = w2p.at[ones_col, ones_col].set(1.0)           # keep constant 1 alive

    w3p = jnp.zeros((LANE, LANE), jnp.float32)
    w3p = w3p.at[:HIDDEN_DIM, :OUT_DIM].set(w3)
    w3p = w3p.at[ones_col, :OUT_DIM].set(b3.reshape(-1))

    return (w1p, b1p, w2p, w3p)


@jax.jit
def quantum_encoder(x, packed_params):
    w1p, b1p, w2p, w3p = packed_params
    B = x.shape[0]

    # Batch tiling: sublane-aligned, capped at 512 rows; once there are >= 16
    # padded rows, split into at least 2 programs so v7x's two TensorCores can
    # each take a share of the "parallel" grid axis (no effect on v5e/v6e).
    B8 = _round_up(max(B, 1), 8)
    tile = min(MAX_TILE, B8)
    if B8 >= 16:
        tile = min(tile, _round_up((B8 + 1) // 2, 8))
    B_pad = _round_up(B8, tile)

    x_pad = jnp.zeros((B_pad, INPUT_DIM), jnp.float32).at[:B, :].set(
        x.astype(jnp.float32))

    out = pl.pallas_call(
        quantum_encoder_kernel,
        out_shape=jax.ShapeDtypeStruct((B_pad, LANE), jnp.float32),
        grid_spec=pltpu.PrefetchScalarGridSpec(
            num_scalar_prefetch=0,
            grid=(B_pad // tile,),
            in_specs=[
                pl.BlockSpec((tile, INPUT_DIM), lambda i: (i, 0)),   # x streams
                pl.BlockSpec((INPUT_DIM, LANE), lambda i: (0, 0)),   # weights pinned:
                pl.BlockSpec((1, LANE), lambda i: (0, 0)),           # constant index_map
                pl.BlockSpec((LANE, LANE), lambda i: (0, 0)),        # -> no re-DMA across
                pl.BlockSpec((LANE, LANE), lambda i: (0, 0)),        #    batch tiles
            ],
            out_specs=pl.BlockSpec((tile, LANE), lambda i: (i, 0)),  # lane-dense slab
        ),
        compiler_params=pltpu.CompilerParams(
            dimension_semantics=("parallel",),   # lets v7x shard batch across its 2 TCs
        ),
    )(x_pad, w1p, b1p, w2p, w3p)

    mu = out[:B, : 2 * QUANTUM_DIM]
    # softplus only on the single useful lane, outside the kernel (frees the EUP slot).
    kappa = jax.nn.softplus(out[:B, 2 * QUANTUM_DIM: 2 * QUANTUM_DIM + 1]) + 1e-6
    return mu, kappa


def init_params(key):
    # Deterministic synthetic init (mimics nn.Linear default scale roughly).
    k1, k2, k3, k4, k5, k6 = jax.random.split(key, 6)
    scale1 = 1.0 / jnp.sqrt(INPUT_DIM)
    scale2 = 1.0 / jnp.sqrt(HIDDEN_DIM)
    w1 = jax.random.uniform(k1, (INPUT_DIM, HIDDEN_DIM), jnp.float32, -scale1, scale1)
    b1 = jax.random.uniform(k2, (1, HIDDEN_DIM), jnp.float32, -scale1, scale1)
    w2 = jax.random.uniform(k3, (HIDDEN_DIM, HIDDEN_DIM), jnp.float32, -scale2, scale2)
    b2 = jax.random.uniform(k4, (1, HIDDEN_DIM), jnp.float32, -scale2, scale2)
    w3 = jax.random.uniform(k5, (HIDDEN_DIM, OUT_DIM), jnp.float32, -scale2, scale2)
    b3 = jax.random.uniform(k6, (1, OUT_DIM), jnp.float32, -scale2, scale2)
    return (w1, b1, w2, b2, w3, b3)


def reference(x, params):
    w1, b1, w2, b2, w3, b3 = params
    dot = lambda a, b: jnp.dot(a, b, precision=jax.lax.Precision.HIGHEST)
    h = jnp.maximum(dot(x, w1) + b1, 0.0)
    h = jnp.maximum(dot(h, w2) + b2, 0.0)
    out = dot(h, w3) + b3
    q = QUANTUM_DIM
    mu = out[:, : 2 * q]
    mu = mu / (jnp.linalg.norm(mu, axis=-1, keepdims=True) + 1e-8)
    kappa = jax.nn.softplus(out[:, 2 * q: 2 * q + 1]) + 1e-6
    return mu, kappa


if __name__ == "__main__":
    key = jax.random.PRNGKey(0)
    kx, kp, kx2 = jax.random.split(key, 3)
    params = init_params(kp)
    packed = pack_params(params)

    # Small demo batch (matches the module spec: batch=2, input_dim=32).
    x = jax.random.normal(kx, (BATCH, INPUT_DIM), jnp.float32)
    mu, kappa = quantum_encoder(x, packed)
    jax.block_until_ready((mu, kappa))

    mu_ref, kappa_ref = reference(x, params)
    assert mu.shape == (BATCH, 2 * QUANTUM_DIM)
    assert kappa.shape == (BATCH, 1)
    assert jnp.allclose(mu, mu_ref, atol=1e-5, rtol=1e-5)
    assert jnp.allclose(kappa, kappa_ref, atol=1e-5, rtol=1e-5)

    # Also exercise the multi-program (>=2 grid steps) path with batch padding.
    x2 = jax.random.normal(kx2, (40, INPUT_DIM), jnp.float32)
    mu2, kappa2 = quantum_encoder(x2, packed)
    jax.block_until_ready((mu2, kappa2))
    mu2_ref, kappa2_ref = reference(x2, params)
    assert jnp.allclose(mu2, mu2_ref, atol=1e-5, rtol=1e-5)
    assert jnp.allclose(kappa2, kappa2_ref, atol=1e-5, rtol=1e-5)

    print("KERNEL_OK")
</pallas_src>

<mosaic_0001>
module attributes {stable_mosaic.version = 11 : i64} {
  func.func @quantum_encoder_kernel(%arg0: i32, %arg1: memref<8x32xf32, #tpu.memory_space<vmem>>, %arg2: memref<32x128xf32, #tpu.memory_space<vmem>>, %arg3: memref<1x128xf32, #tpu.memory_space<vmem>>, %arg4: memref<128x128xf32, #tpu.memory_space<vmem>>, %arg5: memref<128x128xf32, #tpu.memory_space<vmem>>, %arg6: memref<8x128xf32, #tpu.memory_space<vmem>>) attributes {dimension_semantics = [#tpu.dimension_semantics<parallel>], iteration_bounds = array<i64: 1>, scalar_prefetch = 0 : i64, scratch_operands = 0 : i64, tpu.core_type = #tpu.core_type<tc>, window_params = [{transform_indices = @transform_0, window_bounds = array<i64: 8, 32>}, {pipeline_mode = #tpu.pipeline_mode<synchronous>, transform_indices = @transform_1, window_bounds = array<i64: 32, 128>}, {pipeline_mode = #tpu.pipeline_mode<synchronous>, transform_indices = @transform_2, window_bounds = array<i64: 1, 128>}, {pipeline_mode = #tpu.pipeline_mode<synchronous>, transform_indices = @transform_3, window_bounds = array<i64: 128, 128>}, {pipeline_mode = #tpu.pipeline_mode<synchronous>, transform_indices = @transform_4, window_bounds = array<i64: 128, 128>}, {transform_indices = @transform_5, window_bounds = array<i64: 8, 128>}]} {
    %c0 = arith.constant 0 : index
    %c0_0 = arith.constant 0 : index
    %0 = vector.load %arg1[%c0, %c0_0] : memref<8x32xf32, #tpu.memory_space<vmem>>, vector<8x32xf32>
    %c0_1 = arith.constant 0 : index
    %c0_2 = arith.constant 0 : index
    %1 = vector.load %arg2[%c0_1, %c0_2] : memref<32x128xf32, #tpu.memory_space<vmem>>, vector<32x128xf32>
    %cst = arith.constant dense<0.000000e+00> : vector<8x128xf32>
    %2 = tpu.matmul %0, %1, %cst {dimension_numbers = #tpu.dot_dimension_numbers<[1], [0], [0], [1], [0, 0, 1, 1], [], []>} : vector<8x32xf32>, vector<32x128xf32>, vector<8x128xf32> -> vector<8x128xf32>
    %c0_3 = arith.constant 0 : index
    %c0_4 = arith.constant 0 : index
    %3 = vector.load %arg3[%c0_3, %c0_4] : memref<1x128xf32, #tpu.memory_space<vmem>>, vector<1x128xf32>
    %4 = vector.broadcast %3 : vector<1x128xf32> to vector<8x128xf32>
    %5 = arith.addf %2, %4 : vector<8x128xf32>
    %cst_5 = arith.constant 0.000000e+00 : f32
    %6 = vector.broadcast %cst_5 : f32 to vector<8x128xf32>
    %7 = arith.maximumf %5, %6 : vector<8x128xf32>
    %c0_6 = arith.constant 0 : index
    %c0_7 = arith.constant 0 : index
    %8 = vector.load %arg4[%c0_6, %c0_7] : memref<128x128xf32, #tpu.memory_space<vmem>>, vector<128x128xf32>
    %cst_8 = arith.constant dense<0.000000e+00> : vector<8x128xf32>
    %9 = tpu.matmul %7, %8, %cst_8 {dimension_numbers = #tpu.dot_dimension_numbers<[1], [0], [0], [1], [0, 0, 1, 1], [], []>} : vector<8x128xf32>, vector<128x128xf32>, vector<8x128xf32> -> vector<8x128xf32>
    %cst_9 = arith.constant 0.000000e+00 : f32
    %10 = vector.broadcast %cst_9 : f32 to vector<8x128xf32>
    %11 = arith.maximumf %9, %10 : vector<8x128xf32>
    %c0_10 = arith.constant 0 : index
    %c0_11 = arith.constant 0 : index
    %12 = vector.load %arg5[%c0_10, %c0_11] : memref<128x128xf32, #tpu.memory_space<vmem>>, vector<128x128xf32>
    %cst_12 = arith.constant dense<0.000000e+00> : vector<8x128xf32>
    %13 = tpu.matmul %11, %12, %cst_12 {dimension_numbers = #tpu.dot_dimension_numbers<[1], [0], [0], [1], [0, 0, 1, 1], [], []>} : vector<8x128xf32>, vector<128x128xf32>, vector<8x128xf32> -> vector<8x128xf32>
    %14 = tpu.iota {dimensions = array<i32: 1>} : vector<8x128xi32>
    %c16_i32 = arith.constant 16 : i32
    %15 = vector.broadcast %c16_i32 : i32 to vector<8x128xi32>
    %16 = arith.cmpi slt, %14, %15 : vector<8x128xi32>
    %cst_13 = arith.constant 0.000000e+00 : f32
    %17 = vector.broadcast %cst_13 : f32 to vector<8x128xf32>
    %18 = arith.select %16, %13, %17 : vector<8x128xi1>, vector<8x128xf32>
    %19 = arith.mulf %18, %18 : vector<8x128xf32>
    %cst_14 = arith.constant dense<0.000000e+00> : vector<8xf32>
    %20 = vector.multi_reduction <add>, %19, %cst_14 [1] : vector<8x128xf32> to vector<8xf32>
    %21 = vector.shape_cast %20 : vector<8xf32> to vector<8x1xf32>
    %22 = math.sqrt %21 : vector<8x1xf32>
    %cst_15 = arith.constant 9.99999993E-9 : f32
    %23 = vector.broadcast %cst_15 : f32 to vector<8x1xf32>
    %24 = arith.addf %22, %23 : vector<8x1xf32>
    %cst_16 = arith.constant 1.000000e+00 : f32
    %25 = vector.broadcast %cst_16 : f32 to vector<8x1xf32>
    %26 = arith.divf %25, %24 : vector<8x1xf32>
    %27 = vector.broadcast %26 : vector<8x1xf32> to vector<8x128xf32>
    %28 = arith.mulf %13, %27 : vector<8x128xf32>
    %29 = arith.select %16, %28, %13 : vector<8x128xi1>, vector<8x128xf32>
    %c0_17 = arith.constant 0 : index
    %c0_18 = arith.constant 0 : index
    %30 = vector.load %arg6[%c0_17, %c0_18] : memref<8x128xf32, #tpu.memory_space<vmem>>, vector<8x128xf32>
    tpu.vector_store %arg6[%c0_17, %c0_18], %29 {strides = array<i32>} : memref<8x128xf32, #tpu.memory_space<vmem>>, vector<8x128xf32>,
    return
  }
  func.func @transform_0(%arg0: i32) -> (i32, i32) {
    %c0_i32 = arith.constant 0 : i32
    %c0_i32_0 = arith.constant 0 : i32
    return %arg0, %c0_i32 : i32, i32
  }
  func.func @transform_1(%arg0: i32) -> (i32, i32) {
    %c0_i32 = arith.constant 0 : i32
    %c0_i32_0 = arith.constant 0 : i32
    %c0_i32_1 = arith.constant 0 : i32
    return %c0_i32, %c0_i32_0 : i32, i32
  }
  func.func @transform_2(%arg0: i32) -> (i32, i32) {
    %c0_i32 = arith.constant 0 : i32
    %c0_i32_0 = arith.constant 0 : i32
    %c0_i32_1 = arith.constant 0 : i32
    return %c0_i32, %c0_i32_0 : i32, i32
  }
  func.func @transform_3(%arg0: i32) -> (i32, i32) {
    %c0_i32 = arith.constant 0 : i32
    %c0_i32_0 = arith.constant 0 : i32
    %c0_i32_1 = arith.constant 0 : i32
    return %c0_i32, %c0_i32_0 : i32, i32
  }
  func.func @transform_4(%arg0: i32) -> (i32, i32) {
    %c0_i32 = arith.constant 0 : i32
    %c0_i32_0 = arith.constant 0 : i32
    %c0_i32_1 = arith.constant 0 : i32
    return %c0_i32, %c0_i32_0 : i32, i32
  }
  func.func @transform_5(%arg0: i32) -> (i32, i32) {
    %c0_i32 = arith.constant 0 : i32
    %c0_i32_0 = arith.constant 0 : i32
    return %arg0, %c0_i32 : i32, i32
  }
}

</mosaic_0001>

<llo_original>
// kernel: quantum_encoder.1
$region0: #{quantum_encoder.1}
  #allocation0 [shape = 'u32[]', space=smem, size = 0x4, offset = 0x4, fixed_abs, tag = 'smem constant byte address 0x4 - core index']
  #allocation1 [shape = 'u32[144,128]{1,0:T(1,128)}', space=vmem, size = 0x12000, scoped, tag = 'internal scratch']
  %s0 = inlined_call_operand.vmem [shape: f32[8,32], index: 0, kind: input, shape index: {}]
  %s1 = inlined_call_operand.hbm [shape: f32[32,128], index: 1, kind: input, shape index: {}]
  %s2 = inlined_call_operand.vmem [shape: f32[1,128], index: 2, kind: input, shape index: {}]
  %s3 = inlined_call_operand.hbm [shape: f32[128,128], index: 3, kind: input, shape index: {}]
  %s4 = inlined_call_operand.hbm [shape: f32[128,128], index: 4, kind: input, shape index: {}]
  %s5 = inlined_call_operand.vmem [shape: f32[8,128], index: 5, kind: output, shape index: {}]
  %s6 = sld [smem:[#allocation0]]
  $region42: #{quantum_encoder.1} parent=0
    _
  %s8 = ssub.s32 1, %s6
  %s9 = scalar_select 0, %s8, %s6
  $region1: #{quantum_encoder.1} parent=0
    #allocation2 [shape = 'u8[16384]{0}', space=vmem, size = 0x4000, scoped, tag = 'input window, operand 1, single buffered']
    #allocation3 [shape = 's32[1]{0}', space=sflag, size = 0x4, scoped, tag = 'scoped memory for quantum_encoder.1']
    #allocation4 [shape = 'u8[65536]{0}', space=vmem, size = 0x10000, scoped, tag = 'input window, operand 3, single buffered']
    #allocation5 [shape = 's32[1]{0}', space=sflag, size = 0x4, scoped, tag = 'scoped memory for quantum_encoder.1']
    #allocation6 [shape = 'u8[65536]{0}', space=vmem, size = 0x10000, scoped, tag = 'input window, operand 4, single buffered']
    %10 = vsyncpa [#allocation3], 0
    %11 = vsyncpa [#allocation5], 0
    // Predicated region
    $region2: #{quantum_encoder.1} parent=1 // pred_check
      _
    $region3: #{quantum_encoder.1} parent=1 // pred_check_branch
      %13 = sbr.rel (0) target = $region5
    $region4: #{quantum_encoder.1} parent=1 // pred_region
      _
    $region5: #{quantum_encoder.1} parent=1 // pred_fallthru
      _
    // Predicated region
    $region6: #{quantum_encoder.1} parent=1 // pred_check
      _
    $region7: #{quantum_encoder.1} parent=1 // pred_check_branch
      %15 = sbr.rel (0) target = $region9
    $region8: #{quantum_encoder.1} parent=1 // pred_region
      %s17 = ssub.s32 512, 512
      %18 = vsyncadd [#allocation3], %s17
      %s19 = sshll.u32 [#allocation2], 4
      %s20 = int_to_ptr.vmem [resolvable:$true] %s19
      %25 = dma.hbm_to_vmem [thread:$0]  %s1, 512, %s20, [#allocation3], 128, 128, 8
    $region9: #{quantum_encoder.1} parent=1 // pred_fallthru
      _
    // Predicated region
    $region10: #{quantum_encoder.1} parent=1 // pred_check
      _
    $region11: #{quantum_encoder.1} parent=1 // pred_check_branch
      %27 = sbr.rel (0) target = $region13
    $region12: #{quantum_encoder.1} parent=1 // pred_region
      _
    $region13: #{quantum_encoder.1} parent=1 // pred_fallthru
      _
    // Predicated region
    $region14: #{quantum_encoder.1} parent=1 // pred_check
      _
    $region15: #{quantum_encoder.1} parent=1 // pred_check_branch
      %29 = sbr.rel (0) target = $region17
    $region16: #{quantum_encoder.1} parent=1 // pred_region
      %s31 = ssub.s32 2048, 2048
      %32 = vsyncadd [#allocation5], %s31
      %s33 = sshll.u32 [#allocation4], 4
      %s34 = int_to_ptr.vmem [resolvable:$true] %s33
      %39 = dma.hbm_to_vmem [thread:$0]  %s3, 2048, %s34, [#allocation5], 128, 128, 8
    $region17: #{quantum_encoder.1} parent=1 // pred_fallthru
      _
    // Predicated region
    $region18: #{quantum_encoder.1} parent=1 // pred_check
      _
    $region19: #{quantum_encoder.1} parent=1 // pred_check_branch
      %41 = sbr.rel (0) target = $region21
    $region20: #{quantum_encoder.1} parent=1 // pred_region
      %s43 = ssub.s32 2048, 2048
      %44 = vsyncadd [#allocation5], %s43
      %s45 = sshll.u32 [#allocation6], 4
      %s46 = int_to_ptr.vmem [resolvable:$true] %s45
      %51 = dma.hbm_to_vmem [thread:$0]  %s4, 2048, %s46, [#allocation5], 128, 128, 8
    $region21: #{quantum_encoder.1} parent=1 // pred_fallthru
      _
    // Predicated region
    $region22: #{quantum_encoder.1} parent=1 // pred_check
      _
    $region23: #{quantum_encoder.1} parent=1 // pred_check_branch
      %53 = sbr.rel (0) target = $region25
    $region24: #{quantum_encoder.1} parent=1 // pred_region
      %54 = dma.done [#allocation3], 512
    $region25: #{quantum_encoder.1} parent=1 // pred_fallthru
      _
    // Predicated region
    $region26: #{quantum_encoder.1} parent=1 // pred_check
      _
    $region27: #{quantum_encoder.1} parent=1 // pred_check_branch
      %56 = sbr.rel (0) target = $region29
    $region28: #{quantum_encoder.1} parent=1 // pred_region
      %57 = dma.done [#allocation5], 2048
    $region29: #{quantum_encoder.1} parent=1 // pred_fallthru
      _
    // Predicated region
    $region30: #{quantum_encoder.1} parent=1 // pred_check
      _
    $region31: #{quantum_encoder.1} parent=1 // pred_check_branch
      %59 = sbr.rel (0) target = $region33
    $region32: #{quantum_encoder.1} parent=1 // pred_region
      %60 = dma.done [#allocation5], 2048
    $region33: #{quantum_encoder.1} parent=1 // pred_fallthru
      _
    %v61 = vld [vmem:[%s0] sm:$0xff]
    %v62 = vld [vmem:[#allocation2] sm:$0xff]
    %v63 = vld [vmem:[#allocation2 + $0x8] sm:$0xff]
    %v64 = vld [vmem:[#allocation2 + $0x10] sm:$0xff]
    %v65 = vld [vmem:[#allocation2 + $0x18] sm:$0xff]
    %v66 = vld [vmem:[%s2] sm:$0x1]
    %v68 = vlaneseq
    %v69 = vshrl.u32 %v68, 7
    %v70 = vsub.s32 0, %v69
    %v71 = vrot.slane %v66, %v70
    %vm73 = vcmask 261120
    %v75 = vsel %vm73, %v61, 0
    %77 = vmatprep.subr.mxu0 0.0
    %78 = vmatpush1.msra.mxu0 %v62
    %79 = vmatprep.subr.mxu0 0.0
    %80 = vmatpush1.msra.mxu0 %v63
    %81 = vmatprep.subr.mxu0 0.0
    %82 = vmatpush1.msra.mxu0 %v64
    %83 = vmatprep.subr.mxu0 0.0
    %84 = vmatpush1.msra.mxu0 %v65
    %85 = vmatprep.subr.mxu0 0.0
    %86 = vmatpush1.msra.mxu0 0.0
    %87 = vmatprep.subr.mxu0 0.0
    %88 = vmatpush1.msra.mxu0 0.0
    %89 = vmatprep.subr.mxu0 0.0
    %90 = vmatpush1.msra.mxu0 0.0
    %91 = vmatprep.subr.mxu0 0.0
    %92 = vmatpush1.msra.mxu0 0.0
    %93 = vmatprep.subr.mxu0 0.0
    %94 = vmatpush1.msra.mxu0 0.0
    %95 = vmatprep.subr.mxu0 0.0
    %96 = vmatpush1.msra.mxu0 0.0
    %97 = vmatprep.subr.mxu0 0.0
    %98 = vmatpush1.msra.mxu0 0.0
    %99 = vmatprep.subr.mxu0 0.0
    %100 = vmatpush1.msra.mxu0 0.0
    %101 = vmatprep.subr.mxu0 0.0
    %102 = vmatpush1.msra.mxu0 0.0
    %103 = vmatprep.subr.mxu0 0.0
    %104 = vmatpush1.msra.mxu0 0.0
    %105 = vmatprep.subr.mxu0 0.0
    %106 = vmatpush1.msra.mxu0 0.0
    %107 = vmatprep.subr.mxu0 0.0
    %108 = vmatpush1.msra.mxu0 0.0
    %109 = vmatprep.subr.mxu0 0.0
    %110 = vmatpush1.msra.mxu0 0.0
    %111 = vmatprep.subr.mxu0 0.0
    %112 = vmatpush1.msra.mxu0 0.0
    %113 = vmatprep.subr.mxu0 0.0
    %114 = vmatpush1.msra.mxu0 0.0
    %115 = vmatprep.subr.mxu0 0.0
    %116 = vmatpush1.msra.mxu0 0.0
    %117 = vmatprep.subr.mxu0 0.0
    %118 = vmatpush1.msra.mxu0 0.0
    %119 = vmatprep.subr.mxu0 0.0
    %120 = vmatpush1.msra.mxu0 0.0
    %121 = vmatprep.subr.mxu0 0.0
    %122 = vmatpush1.msra.mxu0 0.0
    %123 = vmatprep.subr.mxu0 0.0
    %124 = vmatpush1.msra.mxu0 0.0
    %125 = vmatprep.subr.mxu0 0.0
    %126 = vmatpush1.msra.mxu0 0.0
    %127 = vmatprep.subr.mxu0 0.0
    %128 = vmatpush1.msra.mxu0 0.0
    %129 = vmatprep.subr.mxu0 0.0
    %130 = vmatpush1.msra.mxu0 0.0
    %131 = vmatprep.subr.mxu0 0.0
    %132 = vmatpush1.msra.mxu0 0.0
    %133 = vmatprep.subr.mxu0 0.0
    %134 = vmatpush1.msra.mxu0 0.0
    %135 = vmatprep.subr.mxu0 0.0
    %136 = vmatpush1.msra.mxu0 0.0
    %137 = vmatprep.subr.mxu0 0.0
    %138 = vmatpush1.msra.mxu0 0.0
    %139 = vmatprep.subr.mxu0 0.0
    %140 = vmatpush1.msra.mxu0 0.0
    %141 = vmatprep.mubr.f32.mxu0 0.0
    %142 = vmatmul.mubr.f32.gmra.mrb[0].mxu0 %v75
    %v143 = vpop.f32.mrb[0].mxu0
    %v144 = vadd.f32 %v71, %v143
    %v145 = vpop.f32.mrb[0].mxu0
    %146 = vdwg.mxu0
    %v147 = vmax.f32 %v144, 0.0
    %v148 = vld [vmem:[#allocation4] sm:$0xff]
    %v149 = vld [vmem:[#allocation4 + $0x8] sm:$0xff]
    %v150 = vld [vmem:[#allocation4 + $0x10] sm:$0xff]
    %v151 = vld [vmem:[#allocation4 + $0x18] sm:$0xff]
    %v152 = vld [vmem:[#allocation4 + $0x20] sm:$0xff]
    %v153 = vld [vmem:[#allocation4 + $0x28] sm:$0xff]
    %v154 = vld [vmem:[#allocation4 + $0x30] sm:$0xff]
    %v155 = vld [vmem:[#allocation4 + $0x38] sm:$0xff]
    %v156 = vld [vmem:[#allocation4 + $0x40] sm:$0xff]
    %v157 = vld [vmem:[#allocation4 + $0x48] sm:$0xff]
    %v158 = vld [vmem:[#allocation4 + $0x50] sm:$0xff]
    %v159 = vld [vmem:[#allocation4 + $0x58] sm:$0xff]
    %v160 = vld [vmem:[#allocation4 + $0x60] sm:$0xff]
    %v161 = vld [vmem:[#allocation4 + $0x68] sm:$0xff]
    %v162 = vld [vmem:[#allocation4 + $0x70] sm:$0xff]
    %v163 = vld [vmem:[#allocation4 + $0x78] sm:$0xff]
    %164 = vmatprep.subr.mxu0 0.0
    %165 = vmatpush1.msra.mxu0 %v148
    %166 = vmatprep.subr.mxu0 0.0
    %167 = vmatpush1.msra.mxu0 %v149
    %168 = vmatprep.subr.mxu0 0.0
    %169 = vmatpush1.msra.mxu0 %v150
    %170 = vmatprep.subr.mxu0 0.0
    %171 = vmatpush1.msra.mxu0 %v151
    %172 = vmatprep.subr.mxu0 0.0
    %173 = vmatpush1.msra.mxu0 %v152
    %174 = vmatprep.subr.mxu0 0.0
    %175 = vmatpush1.msra.mxu0 %v153
    %176 = vmatprep.subr.mxu0 0.0
    %177 = vmatpush1.msra.mxu0 %v154
    %178 = vmatprep.subr.mxu0 0.0
    %179 = vmatpush1.msra.mxu0 %v155
    %180 = vmatprep.subr.mxu0 0.0
    %181 = vmatpush1.msra.mxu0 %v156
    %182 = vmatprep.subr.mxu0 0.0
    %183 = vmatpush1.msra.mxu0 %v157
    %184 = vmatprep.subr.mxu0 0.0
    %185 = vmatpush1.msra.mxu0 %v158
    %186 = vmatprep.subr.mxu0 0.0
    %187 = vmatpush1.msra.mxu0 %v159
    %188 = vmatprep.subr.mxu0 0.0
    %189 = vmatpush1.msra.mxu0 %v160
    %190 = vmatprep.subr.mxu0 0.0
    %191 = vmatpush1.msra.mxu0 %v161
    %192 = vmatprep.subr.mxu0 0.0
    %193 = vmatpush1.msra.mxu0 %v162
    %194 = vmatprep.subr.mxu0 0.0
    %195 = vmatpush1.msra.mxu0 %v163
    %196 = vmatprep.subr.mxu0 0.0
    %197 = vmatpush1.msra.mxu0 0.0
    %198 = vmatprep.subr.mxu0 0.0
    %199 = vmatpush1.msra.mxu0 0.0
    %200 = vmatprep.subr.mxu0 0.0
    %201 = vmatpush1.msra.mxu0 0.0
    %202 = vmatprep.subr.mxu0 0.0
    %203 = vmatpush1.msra.mxu0 0.0
    %204 = vmatprep.subr.mxu0 0.0
    %205 = vmatpush1.msra.mxu0 0.0
    %206 = vmatprep.subr.mxu0 0.0
    %207 = vmatpush1.msra.mxu0 0.0
    %208 = vmatprep.subr.mxu0 0.0
    %209 = vmatpush1.msra.mxu0 0.0
    %210 = vmatprep.subr.mxu0 0.0
    %211 = vmatpush1.msra.mxu0 0.0
    %212 = vmatprep.subr.mxu0 0.0
    %213 = vmatpush1.msra.mxu0 0.0
    %214 = vmatprep.subr.mxu0 0.0
    %215 = vmatpush1.msra.mxu0 0.0
    %216 = vmatprep.subr.mxu0 0.0
    %217 = vmatpush1.msra.mxu0 0.0
    %218 = vmatprep.subr.mxu0 0.0
    %219 = vmatpush1.msra.mxu0 0.0
    %220 = vmatprep.subr.mxu0 0.0
    %221 = vmatpush1.msra.mxu0 0.0
    %222 = vmatprep.subr.mxu0 0.0
    %223 = vmatpush1.msra.mxu0 0.0
    %224 = vmatprep.subr.mxu0 0.0
    %225 = vmatpush1.msra.mxu0 0.0
    %226 = vmatprep.subr.mxu0 0.0
    %227 = vmatpush1.msra.mxu0 0.0
    %228 = vmatprep.mubr.f32.mxu0 0.0
    %229 = vmatmul.mubr.f32.gmra.mrb[0].mxu0 %v147
    %v230 = vpop.f32.mrb[0].mxu0
    %v231 = vadd.f32 0.0, %v230
    %v232 = vpop.f32.mrb[0].mxu0
    %233 = vdwg.mxu0
    %v234 = vmax.f32 %v231, 0.0
    %v235 = vld [vmem:[#allocation6] sm:$0xff]
    %v236 = vld [vmem:[#allocation6 + $0x8] sm:$0xff]
    %v237 = vld [vmem:[#allocation6 + $0x10] sm:$0xff]
    %v238 = vld [vmem:[#allocation6 + $0x18] sm:$0xff]
    %v239 = vld [vmem:[#allocation6 + $0x20] sm:$0xff]
    %v240 = vld [vmem:[#allocation6 + $0x28] sm:$0xff]
    %v241 = vld [vmem:[#allocation6 + $0x30] sm:$0xff]
    %v242 = vld [vmem:[#allocation6 + $0x38] sm:$0xff]
    %v243 = vld [vmem:[#allocation6 + $0x40] sm:$0xff]
    %v244 = vld [vmem:[#allocation6 + $0x48] sm:$0xff]
    %v245 = vld [vmem:[#allocation6 + $0x50] sm:$0xff]
    %v246 = vld [vmem:[#allocation6 + $0x58] sm:$0xff]
    %v247 = vld [vmem:[#allocation6 + $0x60] sm:$0xff]
    %v248 = vld [vmem:[#allocation6 + $0x68] sm:$0xff]
    %v249 = vld [vmem:[#allocation6 + $0x70] sm:$0xff]
    %v250 = vld [vmem:[#allocation6 + $0x78] sm:$0xff]
    %251 = vmatprep.subr.mxu0 0.0
    %252 = vmatpush1.msra.mxu0 %v235
    %253 = vmatprep.subr.mxu0 0.0
    %254 = vmatpush1.msra.mxu0 %v236
    %255 = vmatprep.subr.mxu0 0.0
    %256 = vmatpush1.msra.mxu0 %v237
    %257 = vmatprep.subr.mxu0 0.0
    %258 = vmatpush1.msra.mxu0 %v238
    %259 = vmatprep.subr.mxu0 0.0
    %260 = vmatpush1.msra.mxu0 %v239
    %261 = vmatprep.subr.mxu0 0.0
    %262 = vmatpush1.msra.mxu0 %v240
    %263 = vmatprep.subr.mxu0 0.0
    %264 = vmatpush1.msra.mxu0 %v241
    %265 = vmatprep.subr.mxu0 0.0
    %266 = vmatpush1.msra.mxu0 %v242
    %267 = vmatprep.subr.mxu0 0.0
    %268 = vmatpush1.msra.mxu0 %v243
    %269 = vmatprep.subr.mxu0 0.0
    %270 = vmatpush1.msra.mxu0 %v244
    %271 = vmatprep.subr.mxu0 0.0
    %272 = vmatpush1.msra.mxu0 %v245
    %273 = vmatprep.subr.mxu0 0.0
    %274 = vmatpush1.msra.mxu0 %v246
    %275 = vmatprep.subr.mxu0 0.0
    %276 = vmatpush1.msra.mxu0 %v247
    %277 = vmatprep.subr.mxu0 0.0
    %278 = vmatpush1.msra.mxu0 %v248
    %279 = vmatprep.subr.mxu0 0.0
    %280 = vmatpush1.msra.mxu0 %v249
    %281 = vmatprep.subr.mxu0 0.0
    %282 = vmatpush1.msra.mxu0 %v250
    %283 = vmatprep.subr.mxu0 0.0
    %284 = vmatpush1.msra.mxu0 0.0
    %285 = vmatprep.subr.mxu0 0.0
    %286 = vmatpush1.msra.mxu0 0.0
    %287 = vmatprep.subr.mxu0 0.0
    %288 = vmatpush1.msra.mxu0 0.0
    %289 = vmatprep.subr.mxu0 0.0
    %290 = vmatpush1.msra.mxu0 0.0
    %291 = vmatprep.subr.mxu0 0.0
    %292 = vmatpush1.msra.mxu0 0.0
    %293 = vmatprep.subr.mxu0 0.0
    %294 = vmatpush1.msra.mxu0 0.0
    %295 = vmatprep.subr.mxu0 0.0
    %296 = vmatpush1.msra.mxu0 0.0
    %297 = vmatprep.subr.mxu0 0.0
    %298 = vmatpush1.msra.mxu0 0.0
    %299 = vmatprep.subr.mxu0 0.0
    %300 = vmatpush1.msra.mxu0 0.0
    %301 = vmatprep.subr.mxu0 0.0
    %302 = vmatpush1.msra.mxu0 0.0
    %303 = vmatprep.subr.mxu0 0.0
    %304 = vmatpush1.msra.mxu0 0.0
    %305 = vmatprep.subr.mxu0 0.0
    %306 = vmatpush1.msra.mxu0 0.0
    %307 = vmatprep.subr.mxu0 0.0
    %308 = vmatpush1.msra.mxu0 0.0
    %309 = vmatprep.subr.mxu0 0.0
    %310 = vmatpush1.msra.mxu0 0.0
    %311 = vmatprep.subr.mxu0 0.0
    %312 = vmatpush1.msra.mxu0 0.0
    %313 = vmatprep.subr.mxu0 0.0
    %314 = vmatpush1.msra.mxu0 0.0
    %315 = vmatprep.mubr.f32.mxu0 0.0
    %316 = vmatmul.mubr.f32.gmra.mrb[0].mxu0 %v234
    %v317 = vpop.f32.mrb[0].mxu0
    %v318 = vadd.f32 0.0, %v317
    %v319 = vpop.f32.mrb[0].mxu0
    %320 = vdwg.mxu0
    %v321 = vlaneseq
    %v322 = vand.u32 %v321, 127
    %vm323 = vcmp.lt.s32.totalorder %v322, 16
    %v324 = vsel %vm323, %v318, 0.0
    %v325 = vmul.f32 %v324, %v324
    %326 = vadd.xlane.f32.xlu0 %v325
    %v327 = vpop.xlane.xlu0 %326
    %v328 = vrsqrt.pop %v327
    %v329 = vmul.f32 %v327, %v328
    %vm330 = vcmp.eq.f32.partialorder %v327, inf
    %v331 = vsel %vm330, %v327, %v329
    %vm332 = vcmp.eq.f32.partialorder %v327, 0.0
    %v333 = vand.u32 %v327, 2147483648
    %v334 = vsel %vm332, %v333, %v331
    %v335 = vadd.f32 %v334, 1e-08
    %v336 = vrcp.pop %v335
    %v337 = vmul.f32 1.0, %v336
    %v338 = vmul.f32 %v318, %v337
    %v339 = vsel %vm323, %v338, %v318
    %340 = vst [vmem:[%s5] sm:$0xff] %v339
    // Predicated region
    $region34: #{quantum_encoder.1} parent=1 // pred_check
      _
    $region35: #{quantum_encoder.1} parent=1 // pred_check_branch
      %342 = sbr.rel (0) target = $region37
    $region36: #{quantum_encoder.1} parent=1 // pred_region
      _
    $region37: #{quantum_encoder.1} parent=1 // pred_fallthru
      _
    // Predicated region
    $region38: #{quantum_encoder.1} parent=1 // pred_check
      _
    $region39: #{quantum_encoder.1} parent=1 // pred_check_branch
      %344 = sbr.rel (0) target = $region41
    $region40: #{quantum_encoder.1} parent=1 // pred_region
      _
    $region41: #{quantum_encoder.1} parent=1 // pred_fallthru
      _
    %345 = vsyncpa [#allocation3], 1
    %346 = vsyncpa [#allocation5], 1

</llo_original>
